<compile_context>
chip_gen: v5e
topology: v5e:2x2
jax: 0.10.0
libtpu: 0.0.40
codegen_flags: <defaults>
</compile_context>

<pallas_src>
import jax
import jax.numpy as jnp
from jax.experimental import pallas as pl
from jax.experimental.pallas import tpu as pltpu


def _qvalue_kernel(x_ref, a_ref, w1x_ref, w1a_ref, b1_ref, w2_ref, b2_ref,
                   w3_ref, b3_ref, out_ref):
    # Layer 1: K-split matmul replaces the concat; bf16 operands, f32 accum.
    h1 = jnp.dot(x_ref[...].astype(jnp.bfloat16), w1x_ref[...],
                 preferred_element_type=jnp.float32)
    h1 = h1 + jnp.dot(a_ref[...].astype(jnp.bfloat16), w1a_ref[...],
                      preferred_element_type=jnp.float32)
    h1 = jnp.maximum(h1 + b1_ref[...], 0.0)

    # Layer 2: bf16 MXU operands, f32 accumulate, f32 bias + ReLU.
    h2 = jnp.dot(h1.astype(jnp.bfloat16), w2_ref[...],
                 preferred_element_type=jnp.float32)
    h2 = jnp.maximum(h2 + b2_ref[...], 0.0)

    # Layer 3 (N=1 head): VPU multiply + XLU lane reduce, f32 throughout.
    q = jnp.sum(h2 * w3_ref[...], axis=-1, keepdims=True) + b3_ref[0, 0]

    # (tb, 1) column store: only the useful 4 bytes/row go back to HBM.
    out_ref[...] = q.astype(out_ref.dtype)


def _round_up(n, m):
    return ((n + m - 1) // m) * m


def qvalue_net_forward(x, a, params, *, block_b=2048):
    """x: (B, state_dim) f32, a: (B, action_dim) f32 -> (B, 1) f32."""
    w1, b1, w2, b2, w3_row, b3 = params
    B, S = x.shape
    A = a.shape[1]

    # Split fc1's weight along K once (weights only, tiny): layer 1 becomes
    # dot(x, w1x) + dot(a, w1a), so no (B, S+A) concat is ever materialized.
    w1x, w1a = w1[:S], w1[S:]

    # Batch tile: multiple of 8 sublanes, capped at block_b; at least two grid
    # steps when the batch spans more than one sublane tile (both v7x cores).
    if B > 8:
        tb = min(block_b, _round_up(-(-B // 2), 8))
    else:
        tb = 8
    b_pad = _round_up(B, tb)
    if b_pad != B:
        x = jnp.pad(x, ((0, b_pad - B), (0, 0)))
        a = jnp.pad(a, ((0, b_pad - B), (0, 0)))
    nb = b_pad // tb

    def build(single_buffer_consts):
        if single_buffer_consts:
            const = lambda s: pl.BlockSpec(s, lambda i: (0,) * len(s),
                                           pipeline_mode=pl.Buffered(1))
        else:
            const = lambda s: pl.BlockSpec(s, lambda i: (0,) * len(s))
        return pl.pallas_call(
            _qvalue_kernel,
            out_shape=jax.ShapeDtypeStruct((b_pad, 1), jnp.float32),
            grid=(nb,),
            in_specs=[
                pl.BlockSpec((tb, S), lambda i: (i, 0)),   # x, streamed
                pl.BlockSpec((tb, A), lambda i: (i, 0)),   # a, streamed
                const(w1x.shape), const(w1a.shape), const(b1.shape),
                const(w2.shape), const(b2.shape), const(w3_row.shape),
                pl.BlockSpec(memory_space=pltpu.MemorySpace.SMEM),  # b3 scalar
            ],
            out_specs=pl.BlockSpec((tb, 1), lambda i: (i, 0)),
            compiler_params=pltpu.CompilerParams(
                dimension_semantics=("parallel",),
                vmem_limit_bytes=32 * 1024 * 1024),
        )

    args = (x, a, w1x, w1a, b1, w2, b2, w3_row, b3)
    try:
        out_padded = build(True)(*args)
    except Exception:
        # Graceful fallback for JAX builds where pipeline_mode=pl.Buffered(1)
        # is not accepted on pallas_call BlockSpecs (perf-only difference).
        out_padded = build(False)(*args)

    # Padded batch rows carry relu(b1)-derived garbage; slice them away here.
    return out_padded[:B]


def init_params(key, state_dim, hidden_dim, action_dim):
    """Deterministic Xavier-uniform weights, zero biases (matches _initialize_weights)."""
    def xavier(key, fan_in, fan_out):
        limit = jnp.sqrt(6.0 / (fan_in + fan_out))
        return jax.random.uniform(key, (fan_in, fan_out), jnp.float32, -limit, limit)

    k1, k2, k3 = jax.random.split(key, 3)
    in1 = state_dim + action_dim
    w1 = xavier(k1, in1, hidden_dim).astype(jnp.bfloat16)         # (S+A, H) MXU operand
    b1 = jnp.zeros((1, hidden_dim), jnp.float32)
    w2 = xavier(k2, hidden_dim, hidden_dim).astype(jnp.bfloat16)  # (H, H) MXU operand
    b2 = jnp.zeros((1, hidden_dim), jnp.float32)
    w3_row = xavier(k3, hidden_dim, 1).T.astype(jnp.float32)      # (1, H) VPU path, f32
    b3 = jnp.zeros((1, 1), jnp.float32)
    return (w1, b1, w2, b2, w3_row, b3)


def qvalue_net_ref(x, a, params):
    """Pure-JAX reference mirroring the kernel's bf16 operand rounding."""
    w1, b1, w2, b2, w3_row, b3 = params
    cat = jnp.concatenate([x, a], axis=1).astype(jnp.bfloat16)
    h1 = jax.nn.relu(jnp.dot(cat, w1, preferred_element_type=jnp.float32) + b1)
    h2 = jax.nn.relu(jnp.dot(h1.astype(jnp.bfloat16), w2,
                             preferred_element_type=jnp.float32) + b2)
    return jnp.sum(h2 * w3_row, axis=-1, keepdims=True) + b3[0, 0]


if __name__ == "__main__":
    B, state_dim, hidden_dim, action_dim = 2, 16, 32, 4

    key = jax.random.PRNGKey(0)
    kx, ka, kp = jax.random.split(key, 3)
    x = jax.random.normal(kx, (B, state_dim), jnp.float32)
    a = jax.random.normal(ka, (B, action_dim), jnp.float32)
    params = init_params(kp, state_dim, hidden_dim, action_dim)

    out = jax.block_until_ready(qvalue_net_forward(x, a, params))

    ref = qvalue_net_ref(x, a, params)
    assert out.shape == (B, 1)
    assert jnp.allclose(out, ref, atol=1e-3, rtol=1e-3), (out, ref)

    print("KERNEL_OK")
</pallas_src>

<mosaic_0001>
module attributes {stable_mosaic.version = 11 : i64} {
  func.func @_qvalue_kernel(%arg0: i32, %arg1: memref<8x16xf32, #tpu.memory_space<vmem>>, %arg2: memref<8x4xf32, #tpu.memory_space<vmem>>, %arg3: memref<16x32xbf16, #tpu.memory_space<vmem>>, %arg4: memref<4x32xbf16, #tpu.memory_space<vmem>>, %arg5: memref<1x32xf32, #tpu.memory_space<vmem>>, %arg6: memref<32x32xbf16, #tpu.memory_space<vmem>>, %arg7: memref<1x32xf32, #tpu.memory_space<vmem>>, %arg8: memref<1x32xf32, #tpu.memory_space<vmem>>, %arg9: memref<1x1xf32, #tpu.memory_space<smem>>, %arg10: memref<8x1xf32, #tpu.memory_space<vmem>>) attributes {dimension_semantics = [#tpu.dimension_semantics<parallel>], iteration_bounds = array<i64: 1>, scalar_prefetch = 0 : i64, scratch_operands = 0 : i64, tpu.core_type = #tpu.core_type<tc>, window_params = [{transform_indices = @transform_0, window_bounds = array<i64: 8, 16>}, {transform_indices = @transform_1, window_bounds = array<i64: 8, 4>}, {pipeline_mode = #tpu.pipeline_mode<synchronous>, transform_indices = @transform_2, window_bounds = array<i64: 16, 32>}, {pipeline_mode = #tpu.pipeline_mode<synchronous>, transform_indices = @transform_3, window_bounds = array<i64: 4, 32>}, {pipeline_mode = #tpu.pipeline_mode<synchronous>, transform_indices = @transform_4, window_bounds = array<i64: 1, 32>}, {pipeline_mode = #tpu.pipeline_mode<synchronous>, transform_indices = @transform_5, window_bounds = array<i64: 32, 32>}, {pipeline_mode = #tpu.pipeline_mode<synchronous>, transform_indices = @transform_6, window_bounds = array<i64: 1, 32>}, {pipeline_mode = #tpu.pipeline_mode<synchronous>, transform_indices = @transform_7, window_bounds = array<i64: 1, 32>}, {transform_indices = @transform_8, window_bounds = array<i64: 1, 1>}, {transform_indices = @transform_9, window_bounds = array<i64: 8, 1>}]} {
    %c0 = arith.constant 0 : index
    %c0_0 = arith.constant 0 : index
    %0 = vector.load %arg1[%c0, %c0_0] : memref<8x16xf32, #tpu.memory_space<vmem>>, vector<8x16xf32>
    %1 = arith.truncf %0 : vector<8x16xf32> to vector<8x16xbf16>
    %c0_1 = arith.constant 0 : index
    %c0_2 = arith.constant 0 : index
    %2 = vector.load %arg3[%c0_1, %c0_2] : memref<16x32xbf16, #tpu.memory_space<vmem>>, vector<16x32xbf16>
    %cst = arith.constant dense<0.000000e+00> : vector<8x32xf32>
    %3 = tpu.matmul %1, %2, %cst {dimension_numbers = #tpu.dot_dimension_numbers<[1], [0], [0], [1], [0, 0, 1, 1], [], []>} : vector<8x16xbf16>, vector<16x32xbf16>, vector<8x32xf32> -> vector<8x32xf32>
    %c0_3 = arith.constant 0 : index
    %c0_4 = arith.constant 0 : index
    %4 = vector.load %arg2[%c0_3, %c0_4] : memref<8x4xf32, #tpu.memory_space<vmem>>, vector<8x4xf32>
    %5 = arith.truncf %4 : vector<8x4xf32> to vector<8x4xbf16>
    %c0_5 = arith.constant 0 : index
    %c0_6 = arith.constant 0 : index
    %6 = vector.load %arg4[%c0_5, %c0_6] : memref<4x32xbf16, #tpu.memory_space<vmem>>, vector<4x32xbf16>
    %cst_7 = arith.constant dense<0.000000e+00> : vector<8x32xf32>
    %7 = tpu.matmul %5, %6, %cst_7 {dimension_numbers = #tpu.dot_dimension_numbers<[1], [0], [0], [1], [0, 0, 1, 1], [], []>} : vector<8x4xbf16>, vector<4x32xbf16>, vector<8x32xf32> -> vector<8x32xf32>
    %8 = arith.addf %3, %7 : vector<8x32xf32>
    %c0_8 = arith.constant 0 : index
    %c0_9 = arith.constant 0 : index
    %9 = vector.load %arg5[%c0_8, %c0_9] : memref<1x32xf32, #tpu.memory_space<vmem>>, vector<1x32xf32>
    %10 = vector.broadcast %9 : vector<1x32xf32> to vector<8x32xf32>
    %11 = arith.addf %8, %10 : vector<8x32xf32>
    %cst_10 = arith.constant 0.000000e+00 : f32
    %12 = vector.broadcast %cst_10 : f32 to vector<8x32xf32>
    %13 = arith.maximumf %11, %12 : vector<8x32xf32>
    %14 = arith.truncf %13 : vector<8x32xf32> to vector<8x32xbf16>
    %c0_11 = arith.constant 0 : index
    %c0_12 = arith.constant 0 : index
    %15 = vector.load %arg6[%c0_11, %c0_12] : memref<32x32xbf16, #tpu.memory_space<vmem>>, vector<32x32xbf16>
    %cst_13 = arith.constant dense<0.000000e+00> : vector<8x32xf32>
    %16 = tpu.matmul %14, %15, %cst_13 {dimension_numbers = #tpu.dot_dimension_numbers<[1], [0], [0], [1], [0, 0, 1, 1], [], []>} : vector<8x32xbf16>, vector<32x32xbf16>, vector<8x32xf32> -> vector<8x32xf32>
    %c0_14 = arith.constant 0 : index
    %c0_15 = arith.constant 0 : index
    %17 = vector.load %arg7[%c0_14, %c0_15] : memref<1x32xf32, #tpu.memory_space<vmem>>, vector<1x32xf32>
    %18 = vector.broadcast %17 : vector<1x32xf32> to vector<8x32xf32>
    %19 = arith.addf %16, %18 : vector<8x32xf32>
    %cst_16 = arith.constant 0.000000e+00 : f32
    %20 = vector.broadcast %cst_16 : f32 to vector<8x32xf32>
    %21 = arith.maximumf %19, %20 : vector<8x32xf32>
    %c0_17 = arith.constant 0 : index
    %c0_18 = arith.constant 0 : index
    %22 = vector.load %arg8[%c0_17, %c0_18] : memref<1x32xf32, #tpu.memory_space<vmem>>, vector<1x32xf32>
    %23 = vector.broadcast %22 : vector<1x32xf32> to vector<8x32xf32>
    %24 = arith.mulf %21, %23 : vector<8x32xf32>
    %cst_19 = arith.constant dense<0.000000e+00> : vector<8xf32>
    %25 = vector.multi_reduction <add>, %24, %cst_19 [1] : vector<8x32xf32> to vector<8xf32>
    %26 = vector.shape_cast %25 : vector<8xf32> to vector<8x1xf32>
    %c0_20 = arith.constant 0 : index
    %c0_21 = arith.constant 0 : index
    %27 = memref.load %arg9[%c0_20, %c0_21] : memref<1x1xf32, #tpu.memory_space<smem>>
    %28 = vector.broadcast %27 : f32 to vector<8x1xf32>
    %29 = arith.addf %26, %28 : vector<8x1xf32>
    %c0_22 = arith.constant 0 : index
    %c0_23 = arith.constant 0 : index
    %30 = vector.load %arg10[%c0_22, %c0_23] : memref<8x1xf32, #tpu.memory_space<vmem>>, vector<8x1xf32>
    tpu.vector_store %arg10[%c0_22, %c0_23], %29 {strides = array<i32>} : memref<8x1xf32, #tpu.memory_space<vmem>>, vector<8x1xf32>,
    return
  }
  func.func @transform_0(%arg0: i32) -> (i32, i32) {
    %c0_i32 = arith.constant 0 : i32
    %c0_i32_0 = arith.constant 0 : i32
    return %arg0, %c0_i32 : i32, i32
  }
  func.func @transform_1(%arg0: i32) -> (i32, i32) {
    %c0_i32 = arith.constant 0 : i32
    %c0_i32_0 = arith.constant 0 : i32
    return %arg0, %c0_i32 : i32, i32
  }
  func.func @transform_2(%arg0: i32) -> (i32, i32) {
    %c0_i32 = arith.constant 0 : i32
    %c0_i32_0 = arith.constant 0 : i32
    %c0_i32_1 = arith.constant 0 : i32
    return %c0_i32, %c0_i32_0 : i32, i32
  }
  func.func @transform_3(%arg0: i32) -> (i32, i32) {
    %c0_i32 = arith.constant 0 : i32
    %c0_i32_0 = arith.constant 0 : i32
    %c0_i32_1 = arith.constant 0 : i32
    return %c0_i32, %c0_i32_0 : i32, i32
  }
  func.func @transform_4(%arg0: i32) -> (i32, i32) {
    %c0_i32 = arith.constant 0 : i32
    %c0_i32_0 = arith.constant 0 : i32
    %c0_i32_1 = arith.constant 0 : i32
    return %c0_i32, %c0_i32_0 : i32, i32
  }
  func.func @transform_5(%arg0: i32) -> (i32, i32) {
    %c0_i32 = arith.constant 0 : i32
    %c0_i32_0 = arith.constant 0 : i32
    %c0_i32_1 = arith.constant 0 : i32
    return %c0_i32, %c0_i32_0 : i32, i32
  }
  func.func @transform_6(%arg0: i32) -> (i32, i32) {
    %c0_i32 = arith.constant 0 : i32
    %c0_i32_0 = arith.constant 0 : i32
    %c0_i32_1 = arith.constant 0 : i32
    return %c0_i32, %c0_i32_0 : i32, i32
  }
  func.func @transform_7(%arg0: i32) -> (i32, i32) {
    %c0_i32 = arith.constant 0 : i32
    %c0_i32_0 = arith.constant 0 : i32
    %c0_i32_1 = arith.constant 0 : i32
    return %c0_i32, %c0_i32_0 : i32, i32
  }
  func.func @transform_8(%arg0: i32) -> (i32, i32) {
    %c0_i32 = arith.constant 0 : i32
    %c0_i32_0 = arith.constant 0 : i32
    %c0_i32_1 = arith.constant 0 : i32
    return %c0_i32, %c0_i32_0 : i32, i32
  }
  func.func @transform_9(%arg0: i32) -> (i32, i32) {
    %c0_i32 = arith.constant 0 : i32
    %c0_i32_0 = arith.constant 0 : i32
    return %arg0, %c0_i32 : i32, i32
  }
}

module attributes {stable_mosaic.version = 11 : i64} {
  func.func @_qvalue_kernel(%arg0: i32, %arg1: memref<8x16xf32, #tpu.memory_space<vmem>>, %arg2: memref<8x4xf32, #tpu.memory_space<vmem>>, %arg3: memref<16x32xbf16, #tpu.memory_space<vmem>>, %arg4: memref<4x32xbf16, #tpu.memory_space<vmem>>, %arg5: memref<1x32xf32, #tpu.memory_space<vmem>>, %arg6: memref<32x32xbf16, #tpu.memory_space<vmem>>, %arg7: memref<1x32xf32, #tpu.memory_space<vmem>>, %arg8: memref<1x32xf32, #tpu.memory_space<vmem>>, %arg9: memref<1x1xf32, #tpu.memory_space<smem>>, %arg10: memref<8x1xf32, #tpu.memory_space<vmem>>) attributes {dimension_semantics = [#tpu.dimension_semantics<parallel>], iteration_bounds = array<i64: 1>, scalar_prefetch = 0 : i64, scratch_operands = 0 : i64, tpu.core_type = #tpu.core_type<tc>, window_params = [{transform_indices = @transform_0, window_bounds = array<i64: 8, 16>}, {transform_indices = @transform_1, window_bounds = array<i64: 8, 4>}, {pipeline_mode = #tpu.pipeline_mode<synchronous>, transform_indices = @transform_2, window_bounds = array<i64: 16, 32>}, {pipeline_mode = #tpu.pipeline_mode<synchronous>, transform_indices = @transform_3, window_bounds = array<i64: 4, 32>}, {pipeline_mode = #tpu.pipeline_mode<synchronous>, transform_indices = @transform_4, window_bounds = array<i64: 1, 32>}, {pipeline_mode = #tpu.pipeline_mode<synchronous>, transform_indices = @transform_5, window_bounds = array<i64: 32, 32>}, {pipeline_mode = #tpu.pipeline_mode<synchronous>, transform_indices = @transform_6, window_bounds = array<i64: 1, 32>}, {pipeline_mode = #tpu.pipeline_mode<synchronous>, transform_indices = @transform_7, window_bounds = array<i64: 1, 32>}, {transform_indices = @transform_8, window_bounds = array<i64: 1, 1>}, {transform_indices = @transform_9, window_bounds = array<i64: 8, 1>}]} {
    %c0 = arith.constant 0 : index
    %c0_0 = arith.constant 0 : index
    %0 = vector.load %arg1[%c0, %c0_0] : memref<8x16xf32, #tpu.memory_space<vmem>>, vector<8x16xf32>
    %1 = arith.truncf %0 : vector<8x16xf32> to vector<8x16xbf16>
    %c0_1 = arith.constant 0 : index
    %c0_2 = arith.constant 0 : index
    %2 = vector.load %arg3[%c0_1, %c0_2] : memref<16x32xbf16, #tpu.memory_space<vmem>>, vector<16x32xbf16>
    %cst = arith.constant dense<0.000000e+00> : vector<8x32xf32>
    %3 = tpu.matmul %1, %2, %cst {dimension_numbers = #tpu.dot_dimension_numbers<[1], [0], [0], [1], [0, 0, 1, 1], [], []>} : vector<8x16xbf16>, vector<16x32xbf16>, vector<8x32xf32> -> vector<8x32xf32>
    %c0_3 = arith.constant 0 : index
    %c0_4 = arith.constant 0 : index
    %4 = vector.load %arg2[%c0_3, %c0_4] : memref<8x4xf32, #tpu.memory_space<vmem>>, vector<8x4xf32>
    %5 = arith.truncf %4 : vector<8x4xf32> to vector<8x4xbf16>
    %c0_5 = arith.constant 0 : index
    %c0_6 = arith.constant 0 : index
    %6 = vector.load %arg4[%c0_5, %c0_6] : memref<4x32xbf16, #tpu.memory_space<vmem>>, vector<4x32xbf16>
    %cst_7 = arith.constant dense<0.000000e+00> : vector<8x32xf32>
    %7 = tpu.matmul %5, %6, %cst_7 {dimension_numbers = #tpu.dot_dimension_numbers<[1], [0], [0], [1], [0, 0, 1, 1], [], []>} : vector<8x4xbf16>, vector<4x32xbf16>, vector<8x32xf32> -> vector<8x32xf32>
    %8 = arith.addf %3, %7 : vector<8x32xf32>
    %c0_8 = arith.constant 0 : index
    %c0_9 = arith.constant 0 : index
    %9 = vector.load %arg5[%c0_8, %c0_9] : memref<1x32xf32, #tpu.memory_space<vmem>>, vector<1x32xf32>
    %10 = vector.broadcast %9 : vector<1x32xf32> to vector<8x32xf32>
    %11 = arith.addf %8, %10 : vector<8x32xf32>
    %cst_10 = arith.constant 0.000000e+00 : f32
    %12 = vector.broadcast %cst_10 : f32 to vector<8x32xf32>
    %13 = arith.maximumf %11, %12 : vector<8x32xf32>
    %14 = arith.truncf %13 : vector<8x32xf32> to vector<8x32xbf16>
    %c0_11 = arith.constant 0 : index
    %c0_12 = arith.constant 0 : index
    %15 = vector.load %arg6[%c0_11, %c0_12] : memref<32x32xbf16, #tpu.memory_space<vmem>>, vector<32x32xbf16>
    %cst_13 = arith.constant dense<0.000000e+00> : vector<8x32xf32>
    %16 = tpu.matmul %14, %15, %cst_13 {dimension_numbers = #tpu.dot_dimension_numbers<[1], [0], [0], [1], [0, 0, 1, 1], [], []>} : vector<8x32xbf16>, vector<32x32xbf16>, vector<8x32xf32> -> vector<8x32xf32>
    %c0_14 = arith.constant 0 : index
    %c0_15 = arith.constant 0 : index
    %17 = vector.load %arg7[%c0_14, %c0_15] : memref<1x32xf32, #tpu.memory_space<vmem>>, vector<1x32xf32>
    %18 = vector.broadcast %17 : vector<1x32xf32> to vector<8x32xf32>
    %19 = arith.addf %16, %18 : vector<8x32xf32>
    %cst_16 = arith.constant 0.000000e+00 : f32
    %20 = vector.broadcast %cst_16 : f32 to vector<8x32xf32>
    %21 = arith.maximumf %19, %20 : vector<8x32xf32>
    %c0_17 = arith.constant 0 : index
    %c0_18 = arith.constant 0 : index
    %22 = vector.load %arg8[%c0_17, %c0_18] : memref<1x32xf32, #tpu.memory_space<vmem>>, vector<1x32xf32>
    %23 = vector.broadcast %22 : vector<1x32xf32> to vector<8x32xf32>
    %24 = arith.mulf %21, %23 : vector<8x32xf32>
    %cst_19 = arith.constant dense<0.000000e+00> : vector<8xf32>
    %25 = vector.multi_reduction <add>, %24, %cst_19 [1] : vector<8x32xf32> to vector<8xf32>
    %26 = vector.shape_cast %25 : vector<8xf32> to vector<8x1xf32>
    %c0_20 = arith.constant 0 : index
    %c0_21 = arith.constant 0 : index
    %27 = memref.load %arg9[%c0_20, %c0_21] : memref<1x1xf32, #tpu.memory_space<smem>>
    %28 = vector.broadcast %27 : f32 to vector<8x1xf32>
    %29 = arith.addf %26, %28 : vector<8x1xf32>
    %c0_22 = arith.constant 0 : index
    %c0_23 = arith.constant 0 : index
    %30 = vector.load %arg10[%c0_22, %c0_23] : memref<8x1xf32, #tpu.memory_space<vmem>>, vector<8x1xf32>
    tpu.vector_store %arg10[%c0_22, %c0_23], %29 {strides = array<i32>} : memref<8x1xf32, #tpu.memory_space<vmem>>, vector<8x1xf32>,
    return
  }
  func.func @transform_0(%arg0: i32) -> (i32, i32) {
    %c0_i32 = arith.constant 0 : i32
    %c0_i32_0 = arith.constant 0 : i32
    return %arg0, %c0_i32 : i32, i32
  }
  func.func @transform_1(%arg0: i32) -> (i32, i32) {
    %c0_i32 = arith.constant 0 : i32
    %c0_i32_0 = arith.constant 0 : i32
    return %arg0, %c0_i32 : i32, i32
  }
  func.func @transform_2(%arg0: i32) -> (i32, i32) {
    %c0_i32 = arith.constant 0 : i32
    %c0_i32_0 = arith.constant 0 : i32
    %c0_i32_1 = arith.constant 0 : i32
    return %c0_i32, %c0_i32_0 : i32, i32
  }
  func.func @transform_3(%arg0: i32) -> (i32, i32) {
    %c0_i32 = arith.constant 0 : i32
    %c0_i32_0 = arith.constant 0 : i32
    %c0_i32_1 = arith.constant 0 : i32
    return %c0_i32, %c0_i32_0 : i32, i32
  }
  func.func @transform_4(%arg0: i32) -> (i32, i32) {
    %c0_i32 = arith.constant 0 : i32
    %c0_i32_0 = arith.constant 0 : i32
    %c0_i32_1 = arith.constant 0 : i32
    return %c0_i32, %c0_i32_0 : i32, i32
  }
  func.func @transform_5(%arg0: i32) -> (i32, i32) {
    %c0_i32 = arith.constant 0 : i32
    %c0_i32_0 = arith.constant 0 : i32
    %c0_i32_1 = arith.constant 0 : i32
    return %c0_i32, %c0_i32_0 : i32, i32
  }
  func.func @transform_6(%arg0: i32) -> (i32, i32) {
    %c0_i32 = arith.constant 0 : i32
    %c0_i32_0 = arith.constant 0 : i32
    %c0_i32_1 = arith.constant 0 : i32
    return %c0_i32, %c0_i32_0 : i32, i32
  }
  func.func @transform_7(%arg0: i32) -> (i32, i32) {
    %c0_i32 = arith.constant 0 : i32
    %c0_i32_0 = arith.constant 0 : i32
    %c0_i32_1 = arith.constant 0 : i32
    return %c0_i32, %c0_i32_0 : i32, i32
  }
  func.func @transform_8(%arg0: i32) -> (i32, i32) {
    %c0_i32 = arith.constant 0 : i32
    %c0_i32_0 = arith.constant 0 : i32
    %c0_i32_1 = arith.constant 0 : i32
    return %c0_i32, %c0_i32_0 : i32, i32
  }
  func.func @transform_9(%arg0: i32) -> (i32, i32) {
    %c0_i32 = arith.constant 0 : i32
    %c0_i32_0 = arith.constant 0 : i32
    return %arg0, %c0_i32 : i32, i32
  }
}

</mosaic_0001>

<llo_original>
// kernel: tpu_custom_call.1
$region0: #{tpu_custom_call.1}
  #allocation0 [shape = 'u32[]', space=smem, size = 0x4, offset = 0x4, fixed_abs, tag = 'smem constant byte address 0x4 - core index']
  #allocation1 [shape = 'u32[72,128]{1,0:T(1,128)}', space=vmem, size = 0x9000, scoped, tag = 'internal scratch']
  #allocation2 [shape = 'f32[1,1]{1,0:T(1,128)S(6)}', space=smem, size = 0x200, scoped, tag = 'scoped memory for tpu_custom_call.1']
  %s0 = inlined_call_operand.hbm [shape: f32[8,16], index: 0, kind: input, shape index: {}]
  %s1 = inlined_call_operand.vmem [shape: f32[8,4], index: 1, kind: input, shape index: {}]
  %s2 = inlined_call_operand.hbm [shape: bf16[16,32], index: 2, kind: input, shape index: {}]
  %s3 = inlined_call_operand.vmem [shape: bf16[4,32], index: 3, kind: input, shape index: {}]
  %s4 = inlined_call_operand.hbm [shape: f32[1,32], index: 4, kind: input, shape index: {}]
  %s5 = inlined_call_operand.vmem [shape: bf16[32,32], index: 5, kind: input, shape index: {}]
  %s6 = inlined_call_operand.vmem [shape: f32[1,32], index: 6, kind: input, shape index: {}]
  %s7 = inlined_call_operand.vmem [shape: f32[1,32], index: 7, kind: input, shape index: {}]
  %s8 = inlined_call_operand.<no memory space> [shape: f32[1,1], index: 8, kind: input, shape index: {}]
  %s9 = inlined_call_operand.vmem [shape: f32[8,1], index: 9, kind: output, shape index: {}]
  %s10 = sld [smem:[#allocation0]]
  $region58: #{tpu_custom_call.1} parent=0
    _
  %s12 = ssub.s32 1, %s10
  %s13 = scalar_select 0, %s12, %s10
  %14 = sst [smem:[#allocation2]] %s8
  $region1: #{tpu_custom_call.1} parent=0
    #allocation3 [shape = 'u8[4096]{0}', space=vmem, size = 0x1000, scoped, tag = 'input window, operand 0, single buffered']
    #allocation4 [shape = 's32[1]{0}', space=sflag, size = 0x4, scoped, tag = 'scoped memory for tpu_custom_call.1']
    #allocation5 [shape = 'u8[4096]{0}', space=vmem, size = 0x1000, scoped, tag = 'input window, operand 2, single buffered']
    #allocation6 [shape = 's32[1]{0}', space=sflag, size = 0x4, scoped, tag = 'scoped memory for tpu_custom_call.1']
    #allocation7 [shape = 'u8[512]{0}', space=vmem, size = 0x400, scoped, tag = 'input window, operand 4, single buffered']
    %15 = vsyncpa [#allocation4], 0
    %16 = vsyncpa [#allocation6], 0
    // Predicated region
    $region2: #{tpu_custom_call.1} parent=1 // pred_check
      _
    $region3: #{tpu_custom_call.1} parent=1 // pred_check_branch
      %18 = sbr.rel (0) target = $region5
    $region4: #{tpu_custom_call.1} parent=1 // pred_region
      %20 = vsyncadd [#allocation4], 0
      %s22 = sshll.u32 %s0, 4
      %s23 = int_to_ptr.hbm [resolvable:$true] %s22
      %s24 = sshll.u32 [#allocation3], 4
      %s25 = int_to_ptr.vmem [resolvable:$true] %s24
      %27 = dma.hbm_to_vmem [thread:$0]  %s23, 128, %s25, [#allocation4]
    $region5: #{tpu_custom_call.1} parent=1 // pred_fallthru
      _
    // Predicated region
    $region6: #{tpu_custom_call.1} parent=1 // pred_check
      _
    $region7: #{tpu_custom_call.1} parent=1 // pred_check_branch
      %29 = sbr.rel (0) target = $region9
    $region8: #{tpu_custom_call.1} parent=1 // pred_region
      _
    $region9: #{tpu_custom_call.1} parent=1 // pred_fallthru
      _
    // Predicated region
    $region10: #{tpu_custom_call.1} parent=1 // pred_check
      _
    $region11: #{tpu_custom_call.1} parent=1 // pred_check_branch
      %31 = sbr.rel (0) target = $region13
    $region12: #{tpu_custom_call.1} parent=1 // pred_region
      %33 = vsyncadd [#allocation6], 0
      %s34 = sshll.u32 %s2, 4
      %s35 = int_to_ptr.hbm [resolvable:$true] %s34
      %s36 = sshll.u32 [#allocation5], 4
      %s37 = int_to_ptr.vmem [resolvable:$true] %s36
      %42 = dma.hbm_to_vmem [thread:$0]  %s35, 128, %s37, [#allocation6], 64, 64, 4
    $region13: #{tpu_custom_call.1} parent=1 // pred_fallthru
      _
    // Predicated region
    $region14: #{tpu_custom_call.1} parent=1 // pred_check
      _
    $region15: #{tpu_custom_call.1} parent=1 // pred_check_branch
      %44 = sbr.rel (0) target = $region17
    $region16: #{tpu_custom_call.1} parent=1 // pred_region
      _
    $region17: #{tpu_custom_call.1} parent=1 // pred_fallthru
      _
    // Predicated region
    $region18: #{tpu_custom_call.1} parent=1 // pred_check
      _
    $region19: #{tpu_custom_call.1} parent=1 // pred_check_branch
      %46 = sbr.rel (0) target = $region21
    $region20: #{tpu_custom_call.1} parent=1 // pred_region
      %48 = vsyncadd [#allocation6], 0
      %s50 = sshll.u32 %s4, 4
      %s51 = int_to_ptr.hbm [resolvable:$true] %s50
      %s52 = sshll.u32 [#allocation7], 4
      %s53 = int_to_ptr.vmem [resolvable:$true] %s52
      %55 = dma.hbm_to_vmem [thread:$0]  %s51, 16, %s53, [#allocation6]
    $region21: #{tpu_custom_call.1} parent=1 // pred_fallthru
      _
    // Predicated region
    $region22: #{tpu_custom_call.1} parent=1 // pred_check
      _
    $region23: #{tpu_custom_call.1} parent=1 // pred_check_branch
      %57 = sbr.rel (0) target = $region25
    $region24: #{tpu_custom_call.1} parent=1 // pred_region
      _
    $region25: #{tpu_custom_call.1} parent=1 // pred_fallthru
      _
    // Predicated region
    $region26: #{tpu_custom_call.1} parent=1 // pred_check
      _
    $region27: #{tpu_custom_call.1} parent=1 // pred_check_branch
      %59 = sbr.rel (0) target = $region29
    $region28: #{tpu_custom_call.1} parent=1 // pred_region
      _
    $region29: #{tpu_custom_call.1} parent=1 // pred_fallthru
      _
    // Predicated region
    $region30: #{tpu_custom_call.1} parent=1 // pred_check
      _
    $region31: #{tpu_custom_call.1} parent=1 // pred_check_branch
      %61 = sbr.rel (0) target = $region33
    $region32: #{tpu_custom_call.1} parent=1 // pred_region
      _
    $region33: #{tpu_custom_call.1} parent=1 // pred_fallthru
      _
    // Predicated region
    $region34: #{tpu_custom_call.1} parent=1 // pred_check
      _
    $region35: #{tpu_custom_call.1} parent=1 // pred_check_branch
      %63 = sbr.rel (0) target = $region37
    $region36: #{tpu_custom_call.1} parent=1 // pred_region
      _
    $region37: #{tpu_custom_call.1} parent=1 // pred_fallthru
      _
    // Predicated region
    $region38: #{tpu_custom_call.1} parent=1 // pred_check
      _
    $region39: #{tpu_custom_call.1} parent=1 // pred_check_branch
      %65 = sbr.rel (0) target = $region41
    $region40: #{tpu_custom_call.1} parent=1 // pred_region
      %67 = dma.done [#allocation4], 128
    $region41: #{tpu_custom_call.1} parent=1 // pred_fallthru
      _
    // Predicated region
    $region42: #{tpu_custom_call.1} parent=1 // pred_check
      _
    $region43: #{tpu_custom_call.1} parent=1 // pred_check_branch
      %69 = sbr.rel (0) target = $region45
    $region44: #{tpu_custom_call.1} parent=1 // pred_region
      %71 = dma.done [#allocation6], 128
    $region45: #{tpu_custom_call.1} parent=1 // pred_fallthru
      _
    // Predicated region
    $region46: #{tpu_custom_call.1} parent=1 // pred_check
      _
    $region47: #{tpu_custom_call.1} parent=1 // pred_check_branch
      %73 = sbr.rel (0) target = $region49
    $region48: #{tpu_custom_call.1} parent=1 // pred_region
      %75 = dma.done [#allocation6], 16
    $region49: #{tpu_custom_call.1} parent=1 // pred_fallthru
      _
    %v77 = vld [vmem:[#allocation3] sm:$0xff]
    %v78 = vpack.c.bf16 %v77, %v77
    %v79 = vld [vmem:[#allocation5] sm:$0xf]
    %v80 = vld [vmem:[#allocation5 + $0x4] sm:$0xf]
    %v81 = vld [vmem:[%s1] sm:$0xff]
    %v82 = vpack.c.bf16 %v81, %v81
    %v83 = vld [vmem:[%s3] sm:$0x3]
    %vm84 = vcmask 31744
    %v86 = vsel %vm84, %v82, 0
    %vm88 = vcmask 1041408
    %v90 = vsel %vm88, %v83, 0
    %92 = vmatpush.bf16.msra.mxu0 0
    %93 = vmatpush.bf16.msra.mxu0 0
    %94 = vmatpush.bf16.msra.mxu0 0
    %95 = vmatpush.bf16.msra.mxu0 0
    %96 = vmatpush.bf16.msra.mxu0 0
    %97 = vmatpush.bf16.msra.mxu0 0
    %98 = vmatpush.bf16.msra.mxu0 0
    %99 = vmatpush.bf16.msra.mxu0 %v90
    %100 = vmatmul.bf16.gmra.mxu0 %v86
    %v101 = vpop.f32.mrf.mxu0
    %v102 = vadd.f32 0.0, %v101
    %v103 = vpop.f32.mrf.mxu0
    %104 = vdwg.mxu0
    %v107 = vunpack.c.l.b16 %v79
    %v108 = vunpack.c.l.b16 %v80
    %v109 = vpack.c.b16 %v108, %v107
    %vm111 = vcmask 130048
    %v113 = vsel %vm111, %v78, 0
    %115 = vmatpush.bf16.msra.mxu0 0
    %116 = vmatpush.bf16.msra.mxu0 0
    %117 = vmatpush.bf16.msra.mxu0 0
    %118 = vmatpush.bf16.msra.mxu0 0
    %119 = vmatpush.bf16.msra.mxu0 0
    %120 = vmatpush.bf16.msra.mxu0 0
    %121 = vmatpush.bf16.msra.mxu0 0
    %122 = vmatpush.bf16.msra.mxu0 %v109
    %123 = vmatmul.bf16.gmra.mxu0 %v113
    %v124 = vpop.f32.mrf.mxu0
    %v125 = vadd.f32 %v102, %v124
    %v126 = vpop.f32.mrf.mxu0
    %127 = vdwg.mxu0
    %v128 = vld [vmem:[#allocation7] sm:$0x1]
    %v130 = vperm.slane %v128, 0
    %v132 = vadd.f32 %v125, %v130
    %v133 = vmax.f32 %v132, 0.0
    %v134 = vpack.c.bf16 %v133, %v133
    %v135 = vld [vmem:[%s5] sm:$0xf]
    %v136 = vld [vmem:[%s5 + $0x4] sm:$0xf]
    %v137 = vld [vmem:[%s5 + $0x8] sm:$0xf]
    %v138 = vld [vmem:[%s5 + $0xc] sm:$0xf]
    %v139 = vld [vmem:[%s6] sm:$0x1]
    %v141 = vperm.slane %v139, 0
    %v147 = vunpack.c.l.b16 %v135
    %v148 = vunpack.c.l.b16 %v136
    %v149 = vunpack.c.l.b16 %v137
    %v150 = vunpack.c.l.b16 %v138
    %v151 = vpack.c.b16 %v148, %v147
    %v152 = vpack.c.b16 %v150, %v149
    %vm155 = vcmask 261120
    %v157 = vsel %vm155, %v134, 0
    %159 = vmatpush.bf16.msra.mxu0 0
    %160 = vmatpush.bf16.msra.mxu0 0
    %161 = vmatpush.bf16.msra.mxu0 0
    %162 = vmatpush.bf16.msra.mxu0 0
    %163 = vmatpush.bf16.msra.mxu0 0
    %164 = vmatpush.bf16.msra.mxu0 0
    %165 = vmatpush.bf16.msra.mxu0 %v152
    %166 = vmatpush.bf16.msra.mxu0 %v151
    %167 = vmatmul.bf16.gmra.mxu0 %v157
    %v168 = vpop.f32.mrf.mxu0
    %v169 = vadd.f32 %v141, %v168
    %v170 = vpop.f32.mrf.mxu0
    %171 = vdwg.mxu0
    %v172 = vmax.f32 %v169, 0.0
    %v173 = vld [vmem:[%s7] sm:$0x1]
    %v175 = vperm.slane %v173, 0
    %v177 = vmul.f32 %v172, %v175
    %v178 = vsel %vm155, %v177, 0.0
    %179 = vadd.xlane.f32.xlu0 %v178
    %v180 = vpop.xlane.xlu0 %179
    %s181 = sld [smem:[#allocation2]]
    %v182 = vstv %s181
    %v183 = vadd.f32 %v180, %v182
    %vm184 = vcmask 7168
    %185 = vst.msk [vmem:[%s9] sm:$0xff] %vm184, %v183
    // Predicated region
    $region50: #{tpu_custom_call.1} parent=1 // pred_check
      _
    $region51: #{tpu_custom_call.1} parent=1 // pred_check_branch
      %187 = sbr.rel (0) target = $region53
    $region52: #{tpu_custom_call.1} parent=1 // pred_region
      _
    $region53: #{tpu_custom_call.1} parent=1 // pred_fallthru
      _
    // Predicated region
    $region54: #{tpu_custom_call.1} parent=1 // pred_check
      _
    $region55: #{tpu_custom_call.1} parent=1 // pred_check_branch
      %189 = sbr.rel (0) target = $region57
    $region56: #{tpu_custom_call.1} parent=1 // pred_region
      _
    $region57: #{tpu_custom_call.1} parent=1 // pred_fallthru
      _
    %190 = vsyncpa [#allocation4], 1
    %191 = vsyncpa [#allocation6], 1

// kernel: tpu_custom_call.1
$region0: #{tpu_custom_call.1}
  #allocation0 [shape = 'u32[]', space=smem, size = 0x4, offset = 0x4, fixed_abs, tag = 'smem constant byte address 0x4 - core index']
  #allocation1 [shape = 'u32[72,128]{1,0:T(1,128)}', space=vmem, size = 0x9000, scoped, tag = 'internal scratch']
  #allocation2 [shape = 'f32[1,1]{1,0:T(1,128)S(6)}', space=smem, size = 0x200, scoped, tag = 'scoped memory for tpu_custom_call.1']
  %s0 = inlined_call_operand.hbm [shape: f32[8,16], index: 0, kind: input, shape index: {}]
  %s1 = inlined_call_operand.vmem [shape: f32[8,4], index: 1, kind: input, shape index: {}]
  %s2 = inlined_call_operand.hbm [shape: bf16[16,32], index: 2, kind: input, shape index: {}]
  %s3 = inlined_call_operand.vmem [shape: bf16[4,32], index: 3, kind: input, shape index: {}]
  %s4 = inlined_call_operand.hbm [shape: f32[1,32], index: 4, kind: input, shape index: {}]
  %s5 = inlined_call_operand.vmem [shape: bf16[32,32], index: 5, kind: input, shape index: {}]
  %s6 = inlined_call_operand.vmem [shape: f32[1,32], index: 6, kind: input, shape index: {}]
  %s7 = inlined_call_operand.vmem [shape: f32[1,32], index: 7, kind: input, shape index: {}]
  %s8 = inlined_call_operand.<no memory space> [shape: f32[1,1], index: 8, kind: input, shape index: {}]
  %s9 = inlined_call_operand.vmem [shape: f32[8,1], index: 9, kind: output, shape index: {}]
  %s10 = sld [smem:[#allocation0]]
  $region58: #{tpu_custom_call.1} parent=0
    _
  %s12 = ssub.s32 1, %s10
  %s13 = scalar_select 0, %s12, %s10
  %14 = sst [smem:[#allocation2]] %s8
  $region1: #{tpu_custom_call.1} parent=0
    #allocation3 [shape = 'u8[4096]{0}', space=vmem, size = 0x1000, scoped, tag = 'input window, operand 0, single buffered']
    #allocation4 [shape = 's32[1]{0}', space=sflag, size = 0x4, scoped, tag = 'scoped memory for tpu_custom_call.1']
    #allocation5 [shape = 'u8[4096]{0}', space=vmem, size = 0x1000, scoped, tag = 'input window, operand 2, single buffered']
    #allocation6 [shape = 's32[1]{0}', space=sflag, size = 0x4, scoped, tag = 'scoped memory for tpu_custom_call.1']
    #allocation7 [shape = 'u8[512]{0}', space=vmem, size = 0x400, scoped, tag = 'input window, operand 4, single buffered']
    %15 = vsyncpa [#allocation4], 0
    %16 = vsyncpa [#allocation6], 0
    // Predicated region
    $region2: #{tpu_custom_call.1} parent=1 // pred_check
      _
    $region3: #{tpu_custom_call.1} parent=1 // pred_check_branch
      %18 = sbr.rel (0) target = $region5
    $region4: #{tpu_custom_call.1} parent=1 // pred_region
      %20 = vsyncadd [#allocation4], 0
      %s22 = sshll.u32 %s0, 4
      %s23 = int_to_ptr.hbm [resolvable:$true] %s22
      %s24 = sshll.u32 [#allocation3], 4
      %s25 = int_to_ptr.vmem [resolvable:$true] %s24
      %27 = dma.hbm_to_vmem [thread:$0]  %s23, 128, %s25, [#allocation4]
    $region5: #{tpu_custom_call.1} parent=1 // pred_fallthru
      _
    // Predicated region
    $region6: #{tpu_custom_call.1} parent=1 // pred_check
      _
    $region7: #{tpu_custom_call.1} parent=1 // pred_check_branch
      %29 = sbr.rel (0) target = $region9
    $region8: #{tpu_custom_call.1} parent=1 // pred_region
      _
    $region9: #{tpu_custom_call.1} parent=1 // pred_fallthru
      _
    // Predicated region
    $region10: #{tpu_custom_call.1} parent=1 // pred_check
      _
    $region11: #{tpu_custom_call.1} parent=1 // pred_check_branch
      %31 = sbr.rel (0) target = $region13
    $region12: #{tpu_custom_call.1} parent=1 // pred_region
      %33 = vsyncadd [#allocation6], 0
      %s34 = sshll.u32 %s2, 4
      %s35 = int_to_ptr.hbm [resolvable:$true] %s34
      %s36 = sshll.u32 [#allocation5], 4
      %s37 = int_to_ptr.vmem [resolvable:$true] %s36
      %42 = dma.hbm_to_vmem [thread:$0]  %s35, 128, %s37, [#allocation6], 64, 64, 4
    $region13: #{tpu_custom_call.1} parent=1 // pred_fallthru
      _
    // Predicated region
    $region14: #{tpu_custom_call.1} parent=1 // pred_check
      _
    $region15: #{tpu_custom_call.1} parent=1 // pred_check_branch
      %44 = sbr.rel (0) target = $region17
    $region16: #{tpu_custom_call.1} parent=1 // pred_region
      _
    $region17: #{tpu_custom_call.1} parent=1 // pred_fallthru
      _
    // Predicated region
    $region18: #{tpu_custom_call.1} parent=1 // pred_check
      _
    $region19: #{tpu_custom_call.1} parent=1 // pred_check_branch
      %46 = sbr.rel (0) target = $region21
    $region20: #{tpu_custom_call.1} parent=1 // pred_region
      %48 = vsyncadd [#allocation6], 0
      %s50 = sshll.u32 %s4, 4
      %s51 = int_to_ptr.hbm [resolvable:$true] %s50
      %s52 = sshll.u32 [#allocation7], 4
      %s53 = int_to_ptr.vmem [resolvable:$true] %s52
      %55 = dma.hbm_to_vmem [thread:$0]  %s51, 16, %s53, [#allocation6]
    $region21: #{tpu_custom_call.1} parent=1 // pred_fallthru
      _
    // Predicated region
    $region22: #{tpu_custom_call.1} parent=1 // pred_check
      _
    $region23: #{tpu_custom_call.1} parent=1 // pred_check_branch
      %57 = sbr.rel (0) target = $region25
    $region24: #{tpu_custom_call.1} parent=1 // pred_region
      _
    $region25: #{tpu_custom_call.1} parent=1 // pred_fallthru
      _
    // Predicated region
    $region26: #{tpu_custom_call.1} parent=1 // pred_check
      _
    $region27: #{tpu_custom_call.1} parent=1 // pred_check_branch
      %59 = sbr.rel (0) target = $region29
    $region28: #{tpu_custom_call.1} parent=1 // pred_region
      _
    $region29: #{tpu_custom_call.1} parent=1 // pred_fallthru
      _
    // Predicated region
    $region30: #{tpu_custom_call.1} parent=1 // pred_check
      _
    $region31: #{tpu_custom_call.1} parent=1 // pred_check_branch
      %61 = sbr.rel (0) target = $region33
    $region32: #{tpu_custom_call.1} parent=1 // pred_region
      _
    $region33: #{tpu_custom_call.1} parent=1 // pred_fallthru
      _
    // Predicated region
    $region34: #{tpu_custom_call.1} parent=1 // pred_check
      _
    $region35: #{tpu_custom_call.1} parent=1 // pred_check_branch
      %63 = sbr.rel (0) target = $region37
    $region36: #{tpu_custom_call.1} parent=1 // pred_region
      _
    $region37: #{tpu_custom_call.1} parent=1 // pred_fallthru
      _
    // Predicated region
    $region38: #{tpu_custom_call.1} parent=1 // pred_check
      _
    $region39: #{tpu_custom_call.1} parent=1 // pred_check_branch
      %65 = sbr.rel (0) target = $region41
    $region40: #{tpu_custom_call.1} parent=1 // pred_region
      %67 = dma.done [#allocation4], 128
    $region41: #{tpu_custom_call.1} parent=1 // pred_fallthru
      _
    // Predicated region
    $region42: #{tpu_custom_call.1} parent=1 // pred_check
      _
    $region43: #{tpu_custom_call.1} parent=1 // pred_check_branch
      %69 = sbr.rel (0) target = $region45
    $region44: #{tpu_custom_call.1} parent=1 // pred_region
      %71 = dma.done [#allocation6], 128
    $region45: #{tpu_custom_call.1} parent=1 // pred_fallthru
      _
    // Predicated region
    $region46: #{tpu_custom_call.1} parent=1 // pred_check
      _
    $region47: #{tpu_custom_call.1} parent=1 // pred_check_branch
      %73 = sbr.rel (0) target = $region49
    $region48: #{tpu_custom_call.1} parent=1 // pred_region
      %75 = dma.done [#allocation6], 16
    $region49: #{tpu_custom_call.1} parent=1 // pred_fallthru
      _
    %v77 = vld [vmem:[#allocation3] sm:$0xff]
    %v78 = vpack.c.bf16 %v77, %v77
    %v79 = vld [vmem:[#allocation5] sm:$0xf]
    %v80 = vld [vmem:[#allocation5 + $0x4] sm:$0xf]
    %v81 = vld [vmem:[%s1] sm:$0xff]
    %v82 = vpack.c.bf16 %v81, %v81
    %v83 = vld [vmem:[%s3] sm:$0x3]
    %vm84 = vcmask 31744
    %v86 = vsel %vm84, %v82, 0
    %vm88 = vcmask 1041408
    %v90 = vsel %vm88, %v83, 0
    %92 = vmatpush.bf16.msra.mxu0 0
    %93 = vmatpush.bf16.msra.mxu0 0
    %94 = vmatpush.bf16.msra.mxu0 0
    %95 = vmatpush.bf16.msra.mxu0 0
    %96 = vmatpush.bf16.msra.mxu0 0
    %97 = vmatpush.bf16.msra.mxu0 0
    %98 = vmatpush.bf16.msra.mxu0 0
    %99 = vmatpush.bf16.msra.mxu0 %v90
    %100 = vmatmul.bf16.gmra.mxu0 %v86
    %v101 = vpop.f32.mrf.mxu0
    %v102 = vadd.f32 0.0, %v101
    %v103 = vpop.f32.mrf.mxu0
    %104 = vdwg.mxu0
    %v107 = vunpack.c.l.b16 %v79
    %v108 = vunpack.c.l.b16 %v80
    %v109 = vpack.c.b16 %v108, %v107
    %vm111 = vcmask 130048
    %v113 = vsel %vm111, %v78, 0
    %115 = vmatpush.bf16.msra.mxu0 0
    %116 = vmatpush.bf16.msra.mxu0 0
    %117 = vmatpush.bf16.msra.mxu0 0
    %118 = vmatpush.bf16.msra.mxu0 0
    %119 = vmatpush.bf16.msra.mxu0 0
    %120 = vmatpush.bf16.msra.mxu0 0
    %121 = vmatpush.bf16.msra.mxu0 0
    %122 = vmatpush.bf16.msra.mxu0 %v109
    %123 = vmatmul.bf16.gmra.mxu0 %v113
    %v124 = vpop.f32.mrf.mxu0
    %v125 = vadd.f32 %v102, %v124
    %v126 = vpop.f32.mrf.mxu0
    %127 = vdwg.mxu0
    %v128 = vld [vmem:[#allocation7] sm:$0x1]
    %v130 = vperm.slane %v128, 0
    %v132 = vadd.f32 %v125, %v130
    %v133 = vmax.f32 %v132, 0.0
    %v134 = vpack.c.bf16 %v133, %v133
    %v135 = vld [vmem:[%s5] sm:$0xf]
    %v136 = vld [vmem:[%s5 + $0x4] sm:$0xf]
    %v137 = vld [vmem:[%s5 + $0x8] sm:$0xf]
    %v138 = vld [vmem:[%s5 + $0xc] sm:$0xf]
    %v139 = vld [vmem:[%s6] sm:$0x1]
    %v141 = vperm.slane %v139, 0
    %v147 = vunpack.c.l.b16 %v135
    %v148 = vunpack.c.l.b16 %v136
    %v149 = vunpack.c.l.b16 %v137
    %v150 = vunpack.c.l.b16 %v138
    %v151 = vpack.c.b16 %v148, %v147
    %v152 = vpack.c.b16 %v150, %v149
    %vm155 = vcmask 261120
    %v157 = vsel %vm155, %v134, 0
    %159 = vmatpush.bf16.msra.mxu0 0
    %160 = vmatpush.bf16.msra.mxu0 0
    %161 = vmatpush.bf16.msra.mxu0 0
    %162 = vmatpush.bf16.msra.mxu0 0
    %163 = vmatpush.bf16.msra.mxu0 0
    %164 = vmatpush.bf16.msra.mxu0 0
    %165 = vmatpush.bf16.msra.mxu0 %v152
    %166 = vmatpush.bf16.msra.mxu0 %v151
    %167 = vmatmul.bf16.gmra.mxu0 %v157
    %v168 = vpop.f32.mrf.mxu0
    %v169 = vadd.f32 %v141, %v168
    %v170 = vpop.f32.mrf.mxu0
    %171 = vdwg.mxu0
    %v172 = vmax.f32 %v169, 0.0
    %v173 = vld [vmem:[%s7] sm:$0x1]
    %v175 = vperm.slane %v173, 0
    %v177 = vmul.f32 %v172, %v175
    %v178 = vsel %vm155, %v177, 0.0
    %179 = vadd.xlane.f32.xlu0 %v178
    %v180 = vpop.xlane.xlu0 %179
    %s181 = sld [smem:[#allocation2]]
    %v182 = vstv %s181
    %v183 = vadd.f32 %v180, %v182
    %vm184 = vcmask 7168
    %185 = vst.msk [vmem:[%s9] sm:$0xff] %vm184, %v183
    // Predicated region
    $region50: #{tpu_custom_call.1} parent=1 // pred_check
      _
    $region51: #{tpu_custom_call.1} parent=1 // pred_check_branch
      %187 = sbr.rel (0) target = $region53
    $region52: #{tpu_custom_call.1} parent=1 // pred_region
      _
    $region53: #{tpu_custom_call.1} parent=1 // pred_fallthru
      _
    // Predicated region
    $region54: #{tpu_custom_call.1} parent=1 // pred_check
      _
    $region55: #{tpu_custom_call.1} parent=1 // pred_check_branch
      %189 = sbr.rel (0) target = $region57
    $region56: #{tpu_custom_call.1} parent=1 // pred_region
      _
    $region57: #{tpu_custom_call.1} parent=1 // pred_fallthru
      _
    %190 = vsyncpa [#allocation4], 1
    %191 = vsyncpa [#allocation6], 1

</llo_original>
